<compile_context>
chip_gen: v5e
topology: v5e:2x2
jax: 0.10.0
libtpu: 0.0.40
codegen_flags: <defaults>
</compile_context>

<pallas_src>
import functools

import jax
import jax.numpy as jnp
from jax.experimental import pallas as pl
from jax.experimental.pallas import tpu as pltpu


def _round_up(x, m):
    return ((x + m - 1) // m) * m


# ---------------- Stage 1: xw = x @ W (computed once) -------------------------


def _xw_kernel(x_ref, w_ref, o_ref):
    o_ref[...] = jnp.dot(
        x_ref[...], w_ref[...], preferred_element_type=jnp.float32
    ).astype(o_ref.dtype)


def _compute_xw(x_p, w_p, *, tile):
    """x_p: [Nk_pad, Din_p] bf16, w_p: [Din_p, Dout_p] bf16 -> bf16 xw."""
    nk_pad, d_in_p = x_p.shape
    d_out_p = w_p.shape[1]
    return pl.pallas_call(
        _xw_kernel,
        out_shape=jax.ShapeDtypeStruct((nk_pad, d_out_p), jnp.bfloat16),
        grid_spec=pltpu.PrefetchScalarGridSpec(
            num_scalar_prefetch=0,
            grid=(nk_pad // tile,),
            in_specs=[
                pl.BlockSpec((tile, d_in_p), lambda i: (i, 0)),
                pl.BlockSpec((d_in_p, d_out_p), lambda i: (0, 0)),
            ],
            out_specs=pl.BlockSpec((tile, d_out_p), lambda i: (i, 0)),
        ),
        compiler_params=pltpu.CompilerParams(
            dimension_semantics=("parallel",),
        ),
    )(x_p, w_p)


# ---------------- Stage 2: relu(adj @ xw), block-sparse over adj --------------


def _adj_xw_relu_kernel(ids_ref, cnt_ref, adj_ref, xw_ref, o_ref):
    """Grid step (row_tile i, nonzero-block slot s) of relu(adj @ xw)."""
    i = pl.program_id(0)
    s = pl.program_id(1)

    @pl.when(s == 0)
    def _init():
        o_ref[...] = jnp.zeros_like(o_ref)

    # Only accumulate real (nonzero) adj blocks; padded slots are skipped.
    @pl.when(s < cnt_ref[i])
    def _acc():
        o_ref[...] += jnp.dot(
            adj_ref[...], xw_ref[...], preferred_element_type=jnp.float32
        )

    @pl.when(s == pl.num_programs(1) - 1)
    def _finalize():
        o_ref[...] = jnp.maximum(o_ref[...], 0.0)


def _adj_xw_relu(adj_p, xw, block_ids, counts, *, tm, tk, max_nnz):
    """adj_p: [Nr_pad, Nk_pad] bf16, xw: [Nk_pad, Dout_p] bf16 -> f32 out."""
    nr_pad, nk_pad = adj_p.shape
    d_out_p = xw.shape[1]
    nrt = nr_pad // tm

    # Data-dependent index maps driven by the scalar-prefetched block lists.
    def adj_map(i, s, ids, cnt):
        return (i, ids[i * max_nnz + s])

    def xw_map(i, s, ids, cnt):
        return (ids[i * max_nnz + s], 0)

    def out_map(i, s, ids, cnt):
        return (i, 0)

    # Per-step VMEM footprint: double-buffered bf16 adj + xw tiles, resident
    # f32 output tile (x2 for its own buffering).  Stay below v7x's 64 MiB
    # physical VMEM; v5e/v6e (128 MiB) could raise this further.
    step_bytes = (2 * tm * tk * 2
                  + 2 * tk * d_out_p * 2
                  + 2 * tm * d_out_p * 4)
    vmem_limit = int(min(max(2 * step_bytes + (4 << 20), 32 << 20), 56 << 20))

    return pl.pallas_call(
        _adj_xw_relu_kernel,
        out_shape=jax.ShapeDtypeStruct((nr_pad, d_out_p), jnp.float32),
        grid_spec=pltpu.PrefetchScalarGridSpec(
            num_scalar_prefetch=2,          # block_ids, counts -> SMEM
            grid=(nrt, max_nnz),
            in_specs=[
                pl.BlockSpec((tm, tk), adj_map),        # nonzero adj block
                pl.BlockSpec((tk, d_out_p), xw_map),    # matching xw K-slice
            ],
            out_specs=pl.BlockSpec((tm, d_out_p), out_map),
        ),
        compiler_params=pltpu.CompilerParams(
            dimension_semantics=("parallel", "arbitrary"),
            vmem_limit_bytes=vmem_limit,
        ),
    )(block_ids, counts, adj_p, xw)


# ---------------- One-time adjacency preprocessing ----------------------------


def preprocess_adj(adj, row_tile=512, k_tile=1024):
    """Pad + cast adj once and build its block-sparsity metadata.

    adj is constant across GCN layers and training steps, so this runs once
    (eagerly, outside the per-call jit path).
    """
    n = adj.shape[0]
    assert adj.shape == (n, n)
    assert row_tile % 128 == 0 and k_tile % 128 == 0

    n_128 = _round_up(n, 128)
    tm = min(row_tile, n_128)
    tk = min(k_tile, n_128)
    nr_pad = _round_up(n, tm)
    nk_pad = _round_up(n, tk)

    adj_p = jnp.pad(adj.astype(jnp.bfloat16),
                    ((0, nr_pad - n), (0, nk_pad - n)))

    nrt, nkt = nr_pad // tm, nk_pad // tk
    blocks = adj_p.reshape(nrt, tm, nkt, tk)
    nz = jnp.any(blocks != 0, axis=(1, 3))                      # [nrt, nkt]
    counts = jnp.sum(nz, axis=1).astype(jnp.int32)              # [nrt]

    # Nonzero k-block ids first (ascending k), zero blocks pushed to the back.
    k_idx = jnp.arange(nkt, dtype=jnp.int32)[None, :]
    order_key = jnp.where(nz, k_idx, nkt + k_idx)
    ids_sorted = jnp.argsort(order_key, axis=1).astype(jnp.int32)

    max_nnz = max(int(jnp.max(counts)), 1)                      # static

    # Padding slots repeat the last valid block id so the pipeline re-uses the
    # already-fetched block (no extra DMA); accumulation is guarded anyway.
    pos = jnp.arange(max_nnz, dtype=jnp.int32)[None, :]
    last = jnp.maximum(counts[:, None] - 1, 0)
    take = jnp.minimum(pos, last)
    block_ids = jnp.take_along_axis(ids_sorted, take, axis=1)   # [nrt, max_nnz]
    block_ids = block_ids.reshape(-1)                           # 1D for SMEM

    return {
        "adj": adj_p, "block_ids": block_ids, "counts": counts,
        "n": n, "tm": tm, "tk": tk, "max_nnz": max_nnz,
    }


# ---------------- Module-equivalent forward -----------------------------------


def random_uniform_init(key, input_dim, output_dim):
    # Mirrors: torch.rand(in, out) * 2 * r - r,  r = sqrt(6 / (in + out))
    init_range = jnp.sqrt(6.0 / (input_dim + output_dim))
    u = jax.random.uniform(key, (input_dim, output_dim), dtype=jnp.float32)
    return u * 2.0 * init_range - init_range


@functools.partial(jax.jit, static_argnames=("tm", "tk", "max_nnz"))
def _forward_impl(x, weight, adj_p, block_ids, counts, *, tm, tk, max_nnz):
    n, d_in = x.shape
    d_out = weight.shape[1]
    nk_pad = adj_p.shape[1]

    d_in_p = _round_up(d_in, 128)
    d_out_p = _round_up(d_out, 128)   # lane-dense output

    x_p = jnp.pad(x.astype(jnp.bfloat16),
                  ((0, nk_pad - n), (0, d_in_p - d_in)))
    w_p = jnp.pad(weight.astype(jnp.bfloat16),
                  ((0, d_in_p - d_in), (0, d_out_p - d_out)))

    xw = _compute_xw(x_p, w_p, tile=tk)                 # [Nk_pad, Dout_p] bf16
    out = _adj_xw_relu(adj_p, xw, block_ids, counts,
                       tm=tm, tk=tk, max_nnz=max_nnz)   # [Nr_pad, Dout_p] f32
    return out[:n, :d_out]


def graph_conv_sparse_forward(x, adj_prep, weight):
    """relu(adj @ (x @ weight)) — GraphConvSparse.forward with F.relu."""
    assert x.shape[0] == adj_prep["n"]
    assert weight.shape[0] == x.shape[1]
    return _forward_impl(
        x, weight, adj_prep["adj"], adj_prep["block_ids"], adj_prep["counts"],
        tm=adj_prep["tm"], tk=adj_prep["tk"], max_nnz=adj_prep["max_nnz"])


# ---------------- Example / correctness check ---------------------------------

if __name__ == "__main__":
    # Node count deliberately NOT a multiple of 128 (exercises padding); a
    # banded adjacency so some adj blocks are exactly zero (exercises the
    # block-sparse skip path).
    n_nodes, input_dim, output_dim = 300, 64, 32

    key = jax.random.PRNGKey(0)
    kx, ka, kw = jax.random.split(key, 3)

    x = jax.random.normal(kx, (n_nodes, input_dim), dtype=jnp.float32)

    ii = jnp.arange(n_nodes)
    band = (jnp.abs(ii[:, None] - ii[None, :]) <= 32).astype(jnp.float32)
    rand = (jax.random.uniform(ka, (n_nodes, n_nodes)) < 0.3).astype(jnp.float32)
    a_raw = band * rand
    adj = (a_raw + a_raw.T) * 0.5 + jnp.eye(n_nodes, dtype=jnp.float32)
    adj = adj / jnp.sum(adj, axis=1, keepdims=True)   # row-normalized

    weight = random_uniform_init(kw, input_dim, output_dim)
    ref = jnp.maximum(adj @ (x @ weight), 0.0)

    # Small tiles: multiple row tiles, multiple k-blocks, some zero blocks.
    prep_small = preprocess_adj(adj, row_tile=128, k_tile=128)
    out_small = jax.block_until_ready(
        graph_conv_sparse_forward(x, prep_small, weight))

    # Default (large) tiles: clamps to a single block for this tiny graph.
    prep_big = preprocess_adj(adj)
    out_big = jax.block_until_ready(
        graph_conv_sparse_forward(x, prep_big, weight))

    for out in (out_small, out_big):
        assert out.shape == (n_nodes, output_dim)
        # bf16 MXU operands -> bf16-level tolerance vs the f32 reference.
        assert jnp.allclose(out, ref, atol=3e-2, rtol=3e-2), "mismatch vs ref"

    print("KERNEL_OK")
</pallas_src>

<mosaic_0001>
module attributes {stable_mosaic.version = 11 : i64} {
  func.func @_adj_xw_relu_kernel(%arg0: i32, %arg1: i32, %arg2: memref<9xi32, #tpu.memory_space<smem>>, %arg3: memref<3xi32, #tpu.memory_space<smem>>, %arg4: memref<128x128xbf16, #tpu.memory_space<vmem>>, %arg5: memref<128x128xbf16, #tpu.memory_space<vmem>>, %arg6: memref<128x128xf32, #tpu.memory_space<vmem>>) attributes {dimension_semantics = [#tpu.dimension_semantics<parallel>, #tpu.dimension_semantics<arbitrary>], iteration_bounds = array<i64: 3, 3>, scalar_prefetch = 2 : i64, scratch_operands = 0 : i64, tpu.core_type = #tpu.core_type<tc>, window_params = [{transform_indices = @transform_0, window_bounds = array<i64: 128, 128>}, {transform_indices = @transform_1, window_bounds = array<i64: 128, 128>}, {transform_indices = @transform_2, window_bounds = array<i64: 128, 128>}]} {
    %c0_i32 = arith.constant 0 : i32
    %0 = arith.cmpi eq, %arg1, %c0_i32 : i32
    %1 = arith.extui %0 : i1 to i32
    %c0_i32_0 = arith.constant 0 : i32
    %2 = arith.cmpi ne, %1, %c0_i32_0 : i32
    scf.if %2 {
      %cst = arith.constant 0.000000e+00 : f32
      %11 = vector.broadcast %cst : f32 to vector<128x128xf32>
      %c0 = arith.constant 0 : index
      %c0_3 = arith.constant 0 : index
      %12 = vector.load %arg6[%c0, %c0_3] : memref<128x128xf32, #tpu.memory_space<vmem>>, vector<128x128xf32>
      tpu.vector_store %arg6[%c0, %c0_3], %11 {strides = array<i32>} : memref<128x128xf32, #tpu.memory_space<vmem>>, vector<128x128xf32>,
    } else {
    }
    %3 = arith.index_cast %arg0 : i32 to index
    %4 = memref.load %arg3[%3] : memref<3xi32, #tpu.memory_space<smem>>
    %5 = arith.cmpi slt, %arg1, %4 : i32
    %6 = arith.extui %5 : i1 to i32
    %c0_i32_1 = arith.constant 0 : i32
    %7 = arith.cmpi ne, %6, %c0_i32_1 : i32
    scf.if %7 {
      %c0 = arith.constant 0 : index
      %c0_3 = arith.constant 0 : index
      %11 = vector.load %arg6[%c0, %c0_3] : memref<128x128xf32, #tpu.memory_space<vmem>>, vector<128x128xf32>
      %c0_4 = arith.constant 0 : index
      %c0_5 = arith.constant 0 : index
      %12 = vector.load %arg4[%c0_4, %c0_5] : memref<128x128xbf16, #tpu.memory_space<vmem>>, vector<128x128xbf16>
      %c0_6 = arith.constant 0 : index
      %c0_7 = arith.constant 0 : index
      %13 = vector.load %arg5[%c0_6, %c0_7] : memref<128x128xbf16, #tpu.memory_space<vmem>>, vector<128x128xbf16>
      %cst = arith.constant dense<0.000000e+00> : vector<128x128xf32>
      %14 = tpu.matmul %12, %13, %cst {dimension_numbers = #tpu.dot_dimension_numbers<[1], [0], [0], [1], [0, 0, 1, 1], [], []>} : vector<128x128xbf16>, vector<128x128xbf16>, vector<128x128xf32> -> vector<128x128xf32>
      %15 = arith.addf %11, %14 : vector<128x128xf32>
      %c0_8 = arith.constant 0 : index
      %c0_9 = arith.constant 0 : index
      %16 = vector.load %arg6[%c0_8, %c0_9] : memref<128x128xf32, #tpu.memory_space<vmem>>, vector<128x128xf32>
      tpu.vector_store %arg6[%c0_8, %c0_9], %15 {strides = array<i32>} : memref<128x128xf32, #tpu.memory_space<vmem>>, vector<128x128xf32>,
    } else {
    }
    %c2_i32 = arith.constant 2 : i32
    %8 = arith.cmpi eq, %arg1, %c2_i32 : i32
    %9 = arith.extui %8 : i1 to i32
    %c0_i32_2 = arith.constant 0 : i32
    %10 = arith.cmpi ne, %9, %c0_i32_2 : i32
    scf.if %10 {
      %c0 = arith.constant 0 : index
      %c0_3 = arith.constant 0 : index
      %11 = vector.load %arg6[%c0, %c0_3] : memref<128x128xf32, #tpu.memory_space<vmem>>, vector<128x128xf32>
      %cst = arith.constant 0.000000e+00 : f32
      %12 = vector.broadcast %cst : f32 to vector<128x128xf32>
      %13 = arith.maximumf %11, %12 : vector<128x128xf32>
      %c0_4 = arith.constant 0 : index
      %c0_5 = arith.constant 0 : index
      %14 = vector.load %arg6[%c0_4, %c0_5] : memref<128x128xf32, #tpu.memory_space<vmem>>, vector<128x128xf32>
      tpu.vector_store %arg6[%c0_4, %c0_5], %13 {strides = array<i32>} : memref<128x128xf32, #tpu.memory_space<vmem>>, vector<128x128xf32>,
    } else {
    }
    return
  }
  func.func @transform_0(%arg0: i32, %arg1: i32, %arg2: memref<9xi32, #tpu.memory_space<smem>>, %arg3: memref<3xi32, #tpu.memory_space<smem>>) -> (i32, i32) {
    %c3_i32 = arith.constant 3 : i32
    %0 = arith.muli %arg0, %c3_i32 : i32
    %1 = arith.addi %0, %arg1 : i32
    %2 = arith.index_cast %1 : i32 to index
    %3 = memref.load %arg2[%2] : memref<9xi32, #tpu.memory_space<smem>>
    %c0_i32 = arith.constant 0 : i32
    return %arg0, %3 : i32, i32
  }
  func.func @transform_1(%arg0: i32, %arg1: i32, %arg2: memref<9xi32, #tpu.memory_space<smem>>, %arg3: memref<3xi32, #tpu.memory_space<smem>>) -> (i32, i32) {
    %c3_i32 = arith.constant 3 : i32
    %0 = arith.muli %arg0, %c3_i32 : i32
    %1 = arith.addi %0, %arg1 : i32
    %2 = arith.index_cast %1 : i32 to index
    %3 = memref.load %arg2[%2] : memref<9xi32, #tpu.memory_space<smem>>
    %c0_i32 = arith.constant 0 : i32
    %c0_i32_0 = arith.constant 0 : i32
    return %3, %c0_i32 : i32, i32
  }
  func.func @transform_2(%arg0: i32, %arg1: i32, %arg2: memref<9xi32, #tpu.memory_space<smem>>, %arg3: memref<3xi32, #tpu.memory_space<smem>>) -> (i32, i32) {
    %c0_i32 = arith.constant 0 : i32
    %c0_i32_0 = arith.constant 0 : i32
    return %arg0, %c0_i32 : i32, i32
  }
}

module attributes {stable_mosaic.version = 11 : i64} {
  func.func @_xw_kernel(%arg0: i32, %arg1: memref<128x128xbf16, #tpu.memory_space<vmem>>, %arg2: memref<128x128xbf16, #tpu.memory_space<vmem>>, %arg3: memref<128x128xbf16, #tpu.memory_space<vmem>>) attributes {dimension_semantics = [#tpu.dimension_semantics<parallel>], iteration_bounds = array<i64: 3>, scalar_prefetch = 0 : i64, scratch_operands = 0 : i64, tpu.core_type = #tpu.core_type<tc>, window_params = [{transform_indices = @transform_0, window_bounds = array<i64: 128, 128>}, {pipeline_mode = #tpu.pipeline_mode<synchronous>, transform_indices = @transform_1, window_bounds = array<i64: 128, 128>}, {transform_indices = @transform_2, window_bounds = array<i64: 128, 128>}]} {
    %c0 = arith.constant 0 : index
    %c0_0 = arith.constant 0 : index
    %0 = vector.load %arg1[%c0, %c0_0] : memref<128x128xbf16, #tpu.memory_space<vmem>>, vector<128x128xbf16>
    %c0_1 = arith.constant 0 : index
    %c0_2 = arith.constant 0 : index
    %1 = vector.load %arg2[%c0_1, %c0_2] : memref<128x128xbf16, #tpu.memory_space<vmem>>, vector<128x128xbf16>
    %cst = arith.constant dense<0.000000e+00> : vector<128x128xf32>
    %2 = tpu.matmul %0, %1, %cst {dimension_numbers = #tpu.dot_dimension_numbers<[1], [0], [0], [1], [0, 0, 1, 1], [], []>} : vector<128x128xbf16>, vector<128x128xbf16>, vector<128x128xf32> -> vector<128x128xf32>
    %3 = arith.truncf %2 : vector<128x128xf32> to vector<128x128xbf16>
    %c0_3 = arith.constant 0 : index
    %c0_4 = arith.constant 0 : index
    %4 = vector.load %arg3[%c0_3, %c0_4] : memref<128x128xbf16, #tpu.memory_space<vmem>>, vector<128x128xbf16>
    tpu.vector_store %arg3[%c0_3, %c0_4], %3 {strides = array<i32>} : memref<128x128xbf16, #tpu.memory_space<vmem>>, vector<128x128xbf16>,
    return
  }
  func.func @transform_0(%arg0: i32) -> (i32, i32) {
    %c0_i32 = arith.constant 0 : i32
    %c0_i32_0 = arith.constant 0 : i32
    return %arg0, %c0_i32 : i32, i32
  }
  func.func @transform_1(%arg0: i32) -> (i32, i32) {
    %c0_i32 = arith.constant 0 : i32
    %c0_i32_0 = arith.constant 0 : i32
    %c0_i32_1 = arith.constant 0 : i32
    return %c0_i32, %c0_i32_0 : i32, i32
  }
  func.func @transform_2(%arg0: i32) -> (i32, i32) {
    %c0_i32 = arith.constant 0 : i32
    %c0_i32_0 = arith.constant 0 : i32
    return %arg0, %c0_i32 : i32, i32
  }
}

</mosaic_0001>

<llo_original>
// kernel: _forward_impl.2
$region0: #{_forward_impl.2}
  #allocation0 [shape = 'u32[]', space=smem, size = 0x4, offset = 0x4, fixed_abs, tag = 'smem constant byte address 0x4 - core index']
  #allocation1 [shape = 'u32[72,128]{1,0:T(1,128)}', space=vmem, size = 0x9000, scoped, tag = 'internal scratch']
  %s0 = inlined_call_operand.vmem [shape: bf16[384,128], index: 0, kind: input, shape index: {}]
  %s1 = inlined_call_operand.vmem [shape: bf16[128,128], index: 1, kind: input, shape index: {}]
  %s2 = inlined_call_operand.vmem [shape: bf16[384,128], index: 2, kind: output, shape index: {}]
  %s3 = sld [smem:[#allocation0]]
  $region41: #{_forward_impl.2} parent=0
    _
  %s5 = ssub.s32 1, %s3
  %s6 = scalar_select 0, %s5, %s3
  loop: start=0, step=1, limit=5
  $region2: #{_forward_impl.2} parent=0 // loop_pre_header
    _
  $region3: #{_forward_impl.2} parent=0 // loop_header
    %s8 = sphi 0, %s12
    %p9 = scmp.ge.s32.totalorder %s8, 5
    %s18 = sphi 0, %s20
    %s21 = sphi 0, %s18
    %s22 = sphi 0, %s21
    %s38 = sphi 0, %s22
    %s42 = sphi 0, %s42
    %s44 = sphi 0, %s42
    %s45 = sphi 0, %s44
    %s59 = sphi 0, %s45
    %s65 = sphi 0, %s67
    %s68 = sphi 0, %s65
    %s69 = sphi 0, %s68
    %s85 = sphi 0, %s69
  $region4: #{_forward_impl.2} parent=0 // loop_header_branch
    %11 = sbr.rel (%p9) target = $region8
  $region5: #{_forward_impl.2} parent=0 // loop_body
    %s13 = ssub.s32 %s8, 1
    %s14 = ssub.s32 %s8, 2
    %s15 = sadd.s32 %s8, 1
    %s16 = ssub.s32 %s8, %s15
    %p17 = scmp.eq.s32.totalorder %s16, 0
    %s19 = sadd.s32 %s18, 1
    %s20 = scalar_select %p17, %s18, %s19
    %p23 = pneg %p17
    %p24 = scmp.eq.s32.totalorder %s8, 2
    %p25 = por %p23, %p24
    %p26 = scmp.ne.s32.totalorder %s18, %s21
    %p27 = scmp.eq.s32.totalorder %s8, 0
    %p28 = por %p26, %p27
    %p29 = scmp.ne.s32.totalorder %s18, %s21
    %p30 = scmp.eq.s32.totalorder %s13, 2
    %p31 = por %p29, %p30
    %p32 = scmp.ne.s32.totalorder %s21, %s22
    %p33 = scmp.eq.s32.totalorder %s13, 0
    %p34 = por %p32, %p33
    %p35 = scmp.ne.s32.totalorder %s21, %s22
    %p36 = scmp.eq.s32.totalorder %s14, 2
    %p37 = por %p35, %p36
    %p39 = scmp.ne.s32.totalorder %s22, %s38
    %p40 = scmp.eq.s32.totalorder %s14, 0
    %p41 = por %p39, %p40
    %s43 = sadd.s32 %s42, 1
    %p46 = scmp.eq.s32.totalorder %s8, 2
    %p47 = scmp.ne.s32.totalorder %s42, %s44
    %p48 = scmp.eq.s32.totalorder %s8, 0
    %p49 = por %p47, %p48
    %p50 = scmp.ne.s32.totalorder %s42, %s44
    %p51 = scmp.eq.s32.totalorder %s13, 2
    %p52 = por %p50, %p51
    %p53 = scmp.ne.s32.totalorder %s44, %s45
    %p54 = scmp.eq.s32.totalorder %s13, 0
    %p55 = por %p53, %p54
    %p56 = scmp.ne.s32.totalorder %s44, %s45
    %p57 = scmp.eq.s32.totalorder %s14, 2
    %p58 = por %p56, %p57
    %p60 = scmp.ne.s32.totalorder %s45, %s59
    %p61 = scmp.eq.s32.totalorder %s14, 0
    %p62 = por %p60, %p61
    %s63 = ssub.s32 %s8, %s15
    %p64 = scmp.eq.s32.totalorder %s63, 0
    %s66 = sadd.s32 %s65, 1
    %s67 = scalar_select %p64, %s65, %s66
    %p70 = pneg %p64
    %p71 = scmp.eq.s32.totalorder %s8, 2
    %p72 = por %p70, %p71
    %p73 = scmp.ne.s32.totalorder %s65, %s68
    %p74 = scmp.eq.s32.totalorder %s8, 0
    %p75 = por %p73, %p74
    %p76 = scmp.ne.s32.totalorder %s65, %s68
    %p77 = scmp.eq.s32.totalorder %s13, 2
    %p78 = por %p76, %p77
    %p79 = scmp.ne.s32.totalorder %s68, %s69
    %p80 = scmp.eq.s32.totalorder %s13, 0
    %p81 = por %p79, %p80
    %p82 = scmp.ne.s32.totalorder %s68, %s69
    %p83 = scmp.eq.s32.totalorder %s14, 2
    %p84 = por %p82, %p83
    %p86 = scmp.ne.s32.totalorder %s69, %s85
    %p87 = scmp.eq.s32.totalorder %s14, 0
    %p88 = por %p86, %p87
    %p89 = scmp.le.s32.totalorder 1, %s8
    %p90 = scmp.lt.s32.totalorder %s8, 4
    %p91 = pnand %p89, %p90
    %p92 = pneg %p91
    // Predicated region
    $region9: #{_forward_impl.2} parent=5 // pred_check
      _
    $region10: #{_forward_impl.2} parent=5 // pred_check_branch
      %94 = sbr.rel (%p91) target = $region12
    $region11: #{_forward_impl.2} parent=5 // pred_region
      %s95 = ssub.s32 %s8, 1
      // Predicated region
      $region13: #{_forward_impl.2} parent=11 // pred_check
        %p96 = pneg %p55
      $region14: #{_forward_impl.2} parent=11 // pred_check_branch
        %98 = sbr.rel (%p96) target = $region16
      $region15: #{_forward_impl.2} parent=11 // pred_region
        _
      $region16: #{_forward_impl.2} parent=11 // pred_fallthru
        _
    $region12: #{_forward_impl.2} parent=5 // pred_fallthru
      _
    %p99 = scmp.lt.s32.totalorder %s8, 3
    // Predicated region
    $region17: #{_forward_impl.2} parent=5 // pred_check
      %p100 = pneg %p99
    $region18: #{_forward_impl.2} parent=5 // pred_check_branch
      %102 = sbr.rel (%p100) target = $region20
    $region19: #{_forward_impl.2} parent=5 // pred_region
      // Predicated region
      $region21: #{_forward_impl.2} parent=19 // pred_check
        %p103 = pneg %p28
      $region22: #{_forward_impl.2} parent=19 // pred_check_branch
        %105 = sbr.rel (%p103) target = $region24
      $region23: #{_forward_impl.2} parent=19 // pred_region
        %s106 = smul.u32 16, %s8
        %p107 = scmp.lt.s32.totalorder %s106, 47
        %s108 = scalar_select %p107, %s106, 47
        %s109 = smul.addr %s108, 4
        %s110 = scalar_lea.vmem %s0, %s109
        %s111 = smul.u32 16, %s8
      $region24: #{_forward_impl.2} parent=19 // pred_fallthru
        _
    $region20: #{_forward_impl.2} parent=5 // pred_fallthru
      _
    %p112 = scmp.le.s32.totalorder 1, %s8
    %p113 = scmp.lt.s32.totalorder %s8, 4
    %p114 = pnand %p112, %p113
    %p115 = pneg %p114
    // Predicated region
    $region25: #{_forward_impl.2} parent=5 // pred_check
      _
    $region26: #{_forward_impl.2} parent=5 // pred_check_branch
      %117 = sbr.rel (%p114) target = $region28
    $region27: #{_forward_impl.2} parent=5 // pred_region
      %s118 = ssub.s32 %s8, 1
      %s119 = smul.u32 16, %s13
      %p120 = scmp.lt.s32.totalorder %s119, 47
      %s121 = scalar_select %p120, %s119, 47
      %s122 = smul.addr %s121, 4
      %s123 = scalar_lea.vmem %s0, %s122
      %p124 = pneg %p34
      %p125 = pneg %p31
      %p126 = pneg %p55
      %p127 = pneg %p52
      %p128 = pneg %p81
      %p129 = pneg %p78
      %s130 = smul.u32 16, %s13
      %p131 = scmp.lt.s32.totalorder %s130, 47
      %s132 = scalar_select %p131, %s130, 47
      %s133 = smul.addr %s132, 4
      %s134 = scalar_lea.vmem %s2, %s133
      %s135 = smul.u32 16, %s13
      %p136 = scmp.lt.s32.totalorder %s135, 47
      %s137 = scalar_select %p136, %s135, 47
      %s138 = smul.addr %s137, 4
      %s139 = scalar_lea.vmem %s0, %s138
      %s140 = smul.u32 16, %s13
      %s141 = smul.u32 16, %s13
      %p142 = scmp.lt.s32.totalorder %s141, 47
      %s143 = scalar_select %p142, %s141, 47
      %s144 = smul.addr %s143, 4
      %s145 = scalar_lea.vmem %s2, %s144
      %s146 = smul.u32 16, %s13
      %v147 = vld [vmem:[%s139] sm:$0xf]
      %v148 = vld [vmem:[%s139 + $0x4] sm:$0xf]
      %v149 = vld [vmem:[%s139 + $0x8] sm:$0xf]
      %v150 = vld [vmem:[%s139 + $0xc] sm:$0xf]
      %v151 = vld [vmem:[%s139 + $0x10] sm:$0xf]
      %v152 = vld [vmem:[%s139 + $0x14] sm:$0xf]
      %v153 = vld [vmem:[%s139 + $0x18] sm:$0xf]
      %v154 = vld [vmem:[%s139 + $0x1c] sm:$0xf]
      %v155 = vld [vmem:[%s139 + $0x20] sm:$0xf]
      %v156 = vld [vmem:[%s139 + $0x24] sm:$0xf]
      %v157 = vld [vmem:[%s139 + $0x28] sm:$0xf]
      %v158 = vld [vmem:[%s139 + $0x2c] sm:$0xf]
      %v159 = vld [vmem:[%s139 + $0x30] sm:$0xf]
      %v160 = vld [vmem:[%s139 + $0x34] sm:$0xf]
      %v161 = vld [vmem:[%s139 + $0x38] sm:$0xf]
      %v162 = vld [vmem:[%s139 + $0x3c] sm:$0xf]
      %v163 = vld [vmem:[%s1] sm:$0xf]
      %v164 = vld [vmem:[%s1 + $0x4] sm:$0xf]
      %v165 = vld [vmem:[%s1 + $0x8] sm:$0xf]
      %v166 = vld [vmem:[%s1 + $0xc] sm:$0xf]
      %v167 = vld [vmem:[%s1 + $0x10] sm:$0xf]
      %v168 = vld [vmem:[%s1 + $0x14] sm:$0xf]
      %v169 = vld [vmem:[%s1 + $0x18] sm:$0xf]
      %v170 = vld [vmem:[%s1 + $0x1c] sm:$0xf]
      %v171 = vld [vmem:[%s1 + $0x20] sm:$0xf]
      %v172 = vld [vmem:[%s1 + $0x24] sm:$0xf]
      %v173 = vld [vmem:[%s1 + $0x28] sm:$0xf]
      %v174 = vld [vmem:[%s1 + $0x2c] sm:$0xf]
      %v175 = vld [vmem:[%s1 + $0x30] sm:$0xf]
      %v176 = vld [vmem:[%s1 + $0x34] sm:$0xf]
      %v177 = vld [vmem:[%s1 + $0x38] sm:$0xf]
      %v178 = vld [vmem:[%s1 + $0x3c] sm:$0xf]
      %v195 = vunpack.c.l.b16 %v147
      %v196 = vunpack.c.l.b16 %v148
      %v197 = vunpack.c.l.b16 %v149
      %v198 = vunpack.c.l.b16 %v150
      %v199 = vunpack.c.l.b16 %v151
      %v200 = vunpack.c.l.b16 %v152
      %v201 = vunpack.c.l.b16 %v153
      %v202 = vunpack.c.l.b16 %v154
      %v203 = vunpack.c.l.b16 %v155
      %v204 = vunpack.c.l.b16 %v156
      %v205 = vunpack.c.l.b16 %v157
      %v206 = vunpack.c.l.b16 %v158
      %v207 = vunpack.c.l.b16 %v159
      %v208 = vunpack.c.l.b16 %v160
      %v209 = vunpack.c.l.b16 %v161
      %v210 = vunpack.c.l.b16 %v162
      %v211 = vpack.c.b16 %v196, %v195
      %v212 = vpack.c.b16 %v198, %v197
      %v213 = vpack.c.b16 %v200, %v199
      %v214 = vpack.c.b16 %v202, %v201
      %v215 = vpack.c.b16 %v204, %v203
      %v216 = vpack.c.b16 %v206, %v205
      %v217 = vpack.c.b16 %v208, %v207
      %v218 = vpack.c.b16 %v210, %v209
      %v243 = vunpack.c.l.b16 %v163
      %v244 = vunpack.c.l.b16 %v164
      %v245 = vunpack.c.l.b16 %v165
      %v246 = vunpack.c.l.b16 %v166
      %v247 = vunpack.c.l.b16 %v167
      %v248 = vunpack.c.l.b16 %v168
      %v249 = vunpack.c.l.b16 %v169
      %v250 = vunpack.c.l.b16 %v170
      %v251 = vunpack.c.l.b16 %v171
      %v252 = vunpack.c.l.b16 %v172
      %v253 = vunpack.c.l.b16 %v173
      %v254 = vunpack.c.l.b16 %v174
      %v255 = vunpack.c.l.b16 %v175
      %v256 = vunpack.c.l.b16 %v176
      %v257 = vunpack.c.l.b16 %v177
      %v258 = vunpack.c.l.b16 %v178
      %v259 = vpack.c.b16 %v244, %v243
      %v260 = vpack.c.b16 %v246, %v245
      %v261 = vpack.c.b16 %v248, %v247
      %v262 = vpack.c.b16 %v250, %v249
      %v263 = vpack.c.b16 %v252, %v251
      %v264 = vpack.c.b16 %v254, %v253
      %v265 = vpack.c.b16 %v256, %v255
      %v266 = vpack.c.b16 %v258, %v257
      %275 = vmatpush.bf16.msra.mxu0 %v266
      %276 = vmatpush.bf16.msra.mxu0 %v265
      %277 = vmatpush.bf16.msra.mxu0 %v264
      %278 = vmatpush.bf16.msra.mxu0 %v263
      %279 = vmatpush.bf16.msra.mxu0 %v262
      %280 = vmatpush.bf16.msra.mxu0 %v261
      %281 = vmatpush.bf16.msra.mxu0 %v260
      %282 = vmatpush.bf16.msra.mxu0 %v259
      %283 = vmatmul.bf16.gmra.mxu0 %v211
      %v284 = vpop.f32.mrf.mxu0
      %v285 = vadd.f32 0.0, %v284
      %v286 = vpop.f32.mrf.mxu0
      %v287 = vadd.f32 0.0, %v286
      %288 = vmatmul.bf16.gmra.mxu0 %v212
      %v289 = vpop.f32.mrf.mxu0
      %v290 = vadd.f32 0.0, %v289
      %v291 = vpop.f32.mrf.mxu0
      %v292 = vadd.f32 0.0, %v291
      %293 = vmatmul.bf16.gmra.mxu0 %v213
      %v294 = vpop.f32.mrf.mxu0
      %v295 = vadd.f32 0.0, %v294
      %v296 = vpop.f32.mrf.mxu0
      %v297 = vadd.f32 0.0, %v296
      %298 = vmatmul.bf16.gmra.mxu0 %v214
      %v299 = vpop.f32.mrf.mxu0
      %v300 = vadd.f32 0.0, %v299
      %v301 = vpop.f32.mrf.mxu0
      %v302 = vadd.f32 0.0, %v301
      %303 = vmatmul.bf16.gmra.mxu0 %v215
      %v304 = vpop.f32.mrf.mxu0
      %v305 = vadd.f32 0.0, %v304
      %v306 = vpop.f32.mrf.mxu0
      %v307 = vadd.f32 0.0, %v306
      %308 = vmatmul.bf16.gmra.mxu0 %v216
      %v309 = vpop.f32.mrf.mxu0
      %v310 = vadd.f32 0.0, %v309
      %v311 = vpop.f32.mrf.mxu0
      %v312 = vadd.f32 0.0, %v311
      %313 = vmatmul.bf16.gmra.mxu0 %v217
      %v314 = vpop.f32.mrf.mxu0
      %v315 = vadd.f32 0.0, %v314
      %v316 = vpop.f32.mrf.mxu0
      %v317 = vadd.f32 0.0, %v316
      %318 = vmatmul.bf16.gmra.mxu0 %v218
      %v319 = vpop.f32.mrf.mxu0
      %v320 = vadd.f32 0.0, %v319
      %v321 = vpop.f32.mrf.mxu0
      %v322 = vadd.f32 0.0, %v321
      %323 = vdwg.mxu0
      %v324 = vpack.c.bf16 %v285, %v285
      %v325 = vpack.c.bf16 %v287, %v287
      %v326 = vpack.c.bf16 %v290, %v290
      %v327 = vpack.c.bf16 %v292, %v292
      %v328 = vpack.c.bf16 %v295, %v295
      %v329 = vpack.c.bf16 %v297, %v297
      %v330 = vpack.c.bf16 %v300, %v300
      %v331 = vpack.c.bf16 %v302, %v302
      %v332 = vpack.c.bf16 %v305, %v305
      %v333 = vpack.c.bf16 %v307, %v307
      %v334 = vpack.c.bf16 %v310, %v310
      %v335 = vpack.c.bf16 %v312, %v312
      %v336 = vpack.c.bf16 %v315, %v315
      %v337 = vpack.c.bf16 %v317, %v317
      %v338 = vpack.c.bf16 %v320, %v320
      %v339 = vpack.c.bf16 %v322, %v322
      %340 = vst [vmem:[%s145] sm:$0xf] %v324
      %341 = vst [vmem:[%s145 + $0x4] sm:$0xf] %v325
      %342 = vst [vmem:[%s145 + $0x8] sm:$0xf] %v326
      %343 = vst [vmem:[%s145 + $0xc] sm:$0xf] %v327
      %344 = vst [vmem:[%s145 + $0x10] sm:$0xf] %v328
      %345 = vst [vmem:[%s145 + $0x14] sm:$0xf] %v329
      %346 = vst [vmem:[%s145 + $0x18] sm:$0xf] %v330
      %347 = vst [vmem:[%s145 + $0x1c] sm:$0xf] %v331
      %348 = vst [vmem:[%s145 + $0x20] sm:$0xf] %v332
      %349 = vst [vmem:[%s145 + $0x24] sm:$0xf] %v333
      %350 = vst [vmem:[%s145 + $0x28] sm:$0xf] %v334
      %351 = vst [vmem:[%s145 + $0x2c] sm:$0xf] %v335
      %352 = vst [vmem:[%s145 + $0x30] sm:$0xf] %v336
      %353 = vst [vmem:[%s145 + $0x34] sm:$0xf] %v337
      %354 = vst [vmem:[%s145 + $0x38] sm:$0xf] %v338
      %355 = vst [vmem:[%s145 + $0x3c] sm:$0xf] %v339
      %s356 = smul.u32 16, %s13
      %p357 = scmp.lt.s32.totalorder %s356, 47
      %s358 = scalar_select %p357, %s356, 47
      %s359 = smul.addr %s358, 4
      %s360 = scalar_lea.vmem %s2, %s359
      // Predicated region
      $region29: #{_forward_impl.2} parent=27 // pred_check
        %p361 = pneg %p78
      $region30: #{_forward_impl.2} parent=27 // pred_check_branch
        %363 = sbr.rel (%p361) target = $region32
      $region31: #{_forward_impl.2} parent=27 // pred_region
        %s364 = smul.u32 16, %s13
      $region32: #{_forward_impl.2} parent=27 // pred_fallthru
        _
    $region28: #{_forward_impl.2} parent=5 // pred_fallthru
      _
    %p365 = scmp.le.s32.totalorder 2, %s8
    // Predicated region
    $region33: #{_forward_impl.2} parent=5 // pred_check
      %p366 = pneg %p365
    $region34: #{_forward_impl.2} parent=5 // pred_check_branch
      %368 = sbr.rel (%p366) target = $region36
    $region35: #{_forward_impl.2} parent=5 // pred_region
      %s369 = ssub.s32 %s8, 2
      // Predicated region
      $region37: #{_forward_impl.2} parent=35 // pred_check
        %p370 = pneg %p84
      $region38: #{_forward_impl.2} parent=35 // pred_check_branch
        %372 = sbr.rel (%p370) target = $region40
      $region39: #{_forward_impl.2} parent=35 // pred_region
        %s373 = smul.u32 16, %s14
        %p374 = scmp.lt.s32.totalorder %s373, 47
        %s375 = scalar_select %p374, %s373, 47
        %s376 = smul.addr %s375, 4
        %s377 = scalar_lea.vmem %s2, %s376
      $region40: #{_forward_impl.2} parent=35 // pred_fallthru
        _
    $region36: #{_forward_impl.2} parent=5 // pred_fallthru
      _
  $region6: #{_forward_impl.2} parent=0 // loop_footer
    %s12 = sadd.s32 1, %s8
  $region7: #{_forward_impl.2} parent=0 // loop_footer_branch
    %7 = sbr.rel target = $region3
  $region8: #{_forward_impl.2} parent=0 // loop_exit
    _

// kernel: _forward_impl.3
$region0: #{_forward_impl.3}
  #allocation0 [shape = 'u32[]', space=smem, size = 0x4, offset = 0x4, fixed_abs, tag = 'smem constant byte address 0x4 - core index']
  #allocation1 [shape = 'u32[72,128]{1,0:T(1,128)}', space=vmem, size = 0x9000, scoped, tag = 'internal scratch']
  #allocation2 [shape = 's32[1]{0}', space=sflag, size = 0x4, scoped, tag = 'scoped memory for _forward_impl.3']
  #allocation3 [shape = 'u8[512]{0}', space=smem, size = 0x200, scoped, tag = 'prefetched SMEM operand 0']
  #allocation4 [shape = 'u8[512]{0}', space=smem, size = 0x200, scoped, tag = 'prefetched SMEM operand 1']
  %s0 = inlined_call_operand.vmem [shape: s32[9], index: 0, kind: input, shape index: {}]
  %s1 = inlined_call_operand.vmem [shape: s32[3], index: 1, kind: input, shape index: {}]
  %s2 = inlined_call_operand.vmem [shape: bf16[384,384], index: 2, kind: input, shape index: {}]
  %s3 = inlined_call_operand.vmem [shape: bf16[384,128], index: 3, kind: input, shape index: {}]
  %s4 = inlined_call_operand.vmem [shape: f32[384,128], index: 4, kind: output, shape index: {}]
  %s5 = sld [smem:[#allocation0]]
  $region94: #{_forward_impl.3} parent=0
    _
  %s7 = ssub.s32 1, %s5
  %s8 = scalar_select 0, %s7, %s5
  %s10 = sshll.u32 %s0, 4
  %s11 = int_to_ptr.vmem [resolvable:$true] %s10
  %13 = dma.vmem_to_smem %s11, 16, [#allocation3], [#allocation2]
  %s15 = sshll.u32 %s1, 4
  %s16 = int_to_ptr.vmem [resolvable:$true] %s15
  %18 = dma.vmem_to_smem %s16, 16, [#allocation4], [#allocation2]
  %20 = dma.done [#allocation2], 32
  %21 = sfence
  $region1: #{_forward_impl.3} parent=0
    #allocation5 [shape = 'u8[65536]{0}', space=vmem, size = 0x10000, scoped, tag = 'input window, operand 2']
    loop: start=0, step=1, limit=11
    $region2: #{_forward_impl.3} parent=1 // loop_pre_header
      _
    $region3: #{_forward_impl.3} parent=1 // loop_header
      %s23 = sphi 0, %s27
      %p24 = scmp.ge.s32.totalorder %s23, 11
      %s30 = sphi 0, %s42
      %s31 = sphi 0, %s38
      %s32 = sphi 0, %s30
      %s33 = sphi 0, %s31
      %s34 = sphi 0, %s32
      %s35 = sphi 0, %s33
      %s53 = sphi 0, %s55
      %s56 = sphi 0, %s53
      %s57 = sphi 0, %s56
      %s73 = sphi 0, %s57
      %s85 = sphi 0, %s87
      %s88 = sphi 0, %s85
      %s89 = sphi 0, %s88
      %s105 = sphi 0, %s89
      %s111 = sphi 0, %s113
      %s114 = sphi 0, %s111
      %s115 = sphi 0, %s114
      %s131 = sphi 0, %s115
    $region4: #{_forward_impl.3} parent=1 // loop_header_branch
      %26 = sbr.rel (%p24) target = $region8
    $region5: #{_forward_impl.3} parent=1 // loop_body
      %s28 = ssub.s32 %s23, 1
      %s29 = ssub.s32 %s23, 2
      %s36 = sadd.s32 1, %s31
      %p37 = scmp.ge.s32.totalorder %s36, 3
      %s38 = scalar_select %p37, 0, %s36
      %s39 = sadd.s32 1, %s30
      %s40 = scalar_select %p37, %s39, %s30
      %p41 = scmp.ge.s32.totalorder %s40, 3
      %s42 = scalar_select %p41, 0, %s40
      %s43 = smul.u32 %s30, 3
      %s44 = sadd.s32 %s43, %s31
      %s45 = sld [smem:[#allocation3 + %s44]]
      %s46 = smul.u32 %s42, 3
      %s47 = sadd.s32 %s46, %s38
      %s48 = sld [smem:[#allocation3 + %s47]]
      %s49 = ssub.s32 %s30, %s42
      %s50 = ssub.s32 %s45, %s48
      %s51 = sor.u32 %s49, %s50
      %p52 = scmp.eq.s32.totalorder %s51, 0
      %s54 = sadd.s32 %s53, 1
      %s55 = scalar_select %p52, %s53, %s54
      %p58 = pneg %p52
      %p59 = scmp.eq.s32.totalorder %s23, 8
      %p60 = por %p58, %p59
      %p61 = scmp.ne.s32.totalorder %s53, %s56
      %p62 = scmp.eq.s32.totalorder %s23, 0
      %p63 = por %p61, %p62
      %p64 = scmp.ne.s32.totalorder %s53, %s56
      %p65 = scmp.eq.s32.totalorder %s28, 8
      %p66 = por %p64, %p65
      %p67 = scmp.ne.s32.totalorder %s56, %s57
      %p68 = scmp.eq.s32.totalorder %s28, 0
      %p69 = por %p67, %p68
      %p70 = scmp.ne.s32.totalorder %s56, %s57
      %p71 = scmp.eq.s32.totalorder %s29, 8
      %p72 = por %p70, %p71
      %p74 = scmp.ne.s32.totalorder %s57, %s73
      %p75 = scmp.eq.s32.totalorder %s29, 0
      %p76 = por %p74, %p75
      %s77 = smul.u32 %s30, 3
      %s78 = sadd.s32 %s77, %s31
      %s79 = sld [smem:[#allocation3 + %s78]]
      %s80 = smul.u32 %s42, 3
      %s81 = sadd.s32 %s80, %s38
      %s82 = sld [smem:[#allocation3 + %s81]]
      %s83 = ssub.s32 %s79, %s82
      %p84 = scmp.eq.s32.totalorder %s83, 0
      %s86 = sadd.s32 %s85, 1
      %s87 = scalar_select %p84, %s85, %s86
      %p90 = pneg %p84
      %p91 = scmp.eq.s32.totalorder %s23, 8
      %p92 = por %p90, %p91
      %p93 = scmp.ne.s32.totalorder %s85, %s88
      %p94 = scmp.eq.s32.totalorder %s23, 0
      %p95 = por %p93, %p94
      %p96 = scmp.ne.s32.totalorder %s85, %s88
      %p97 = scmp.eq.s32.totalorder %s28, 8
      %p98 = por %p96, %p97
      %p99 = scmp.ne.s32.totalorder %s88, %s89
      %p100 = scmp.eq.s32.totalorder %s28, 0
      %p101 = por %p99, %p100
      %p102 = scmp.ne.s32.totalorder %s88, %s89
      %p103 = scmp.eq.s32.totalorder %s29, 8
      %p104 = por %p102, %p103
      %p106 = scmp.ne.s32.totalorder %s89, %s105
      %p107 = scmp.eq.s32.totalorder %s29, 0
      %p108 = por %p106, %p107
      %s109 = ssub.s32 %s30, %s42
      %p110 = scmp.eq.s32.totalorder %s109, 0
      %s112 = sadd.s32 %s111, 1
      %s113 = scalar_select %p110, %s111, %s112
      %p116 = pneg %p110
      %p117 = scmp.eq.s32.totalorder %s23, 8
      %p118 = por %p116, %p117
      %p119 = scmp.ne.s32.totalorder %s111, %s114
      %p120 = scmp.eq.s32.totalorder %s23, 0
      %p121 = por %p119, %p120
      %p122 = scmp.ne.s32.totalorder %s111, %s114
      %p123 = scmp.eq.s32.totalorder %s28, 8
      %p124 = por %p122, %p123
      %p125 = scmp.ne.s32.totalorder %s114, %s115
      %p126 = scmp.eq.s32.totalorder %s28, 0
      %p127 = por %p125, %p126
      %p128 = scmp.ne.s32.totalorder %s114, %s115
      %p129 = scmp.eq.s32.totalorder %s29, 8
      %p130 = por %p128, %p129
      %p132 = scmp.ne.s32.totalorder %s115, %s131
      %p133 = scmp.eq.s32.totalorder %s29, 0
      %p134 = por %p132, %p133
      %p135 = scmp.le.s32.totalorder 1, %s23
      %p136 = scmp.lt.s32.totalorder %s23, 10
      %p137 = pnand %p135, %p136
      %p138 = pneg %p137
      // Predicated region
      $region9: #{_forward_impl.3} parent=5 // pred_check
        _
      $region10: #{_forward_impl.3} parent=5 // pred_check_branch
        %140 = sbr.rel (%p137) target = $region12
      $region11: #{_forward_impl.3} parent=5 // pred_region
        %s141 = ssub.s32 %s23, 1
      $region12: #{_forward_impl.3} parent=5 // pred_fallthru
        _
      %p142 = scmp.lt.s32.totalorder %s23, 9
      // Predicated region
      $region13: #{_forward_impl.3} parent=5 // pred_check
        %p143 = pneg %p142
      $region14: #{_forward_impl.3} parent=5 // pred_check_branch
        %145 = sbr.rel (%p143) target = $region16
      $region15: #{_forward_impl.3} parent=5 // pred_region
        // Predicated region
        $region17: #{_forward_impl.3} parent=15 // pred_check
          %p146 = pneg %p63
        $region18: #{_forward_impl.3} parent=15 // pred_check_branch
          %148 = sbr.rel (%p146) target = $region20
        $region19: #{_forward_impl.3} parent=15 // pred_region
          %s149 = sand.u32 %s53, 1
          %s150 = sand.u32 %s53, 1
          %s151 = smul.addr %s150, 64
          %s152 = scalar_lea.vmem [#allocation5], %s151
          %s153 = smul.u32 %s30, 3
          %s154 = sadd.s32 %s153, %s31
          %s155 = sld [smem:[#allocation3 + %s154]]
          %s156 = smul.u32 16, %s30
          %s157 = smul.addr %s156, 3
          %s158 = sadd.s32 %s155, %s157
          %s159 = smul.addr %s158, 4
          %s160 = scalar_lea.vmem %s2, %s159
          // Predicated region
          $region21: #{_forward_impl.3} parent=19 // pred_check
            _
          $region22: #{_forward_impl.3} parent=19 // pred_check_branch
            %162 = sbr.rel (0) target = $region24
          $region23: #{_forward_impl.3} parent=19 // pred_region
            // Predicated region
            $region25: #{_forward_impl.3} parent=23 // pred_check
              _
            $region26: #{_forward_impl.3} parent=23 // pred_check_branch
              %164 = sbr.rel target = $region28
            $region27: #{_forward_impl.3} parent=23 // pred_region
              // Predicated region
              $region40: #{_forward_impl.3} parent=27 // pred_check
                _
              $region41: #{_forward_impl.3} parent=27 // pred_check_branch
                %210 = sbr.rel (0) target = $region43
              $region42: #{_forward_impl.3} parent=27 // pred_region
                loop: start=0, step=1, limit=1
                $region44: #{_forward_impl.3} parent=42 // loop_pre_header
                  _
                $region45: #{_forward_impl.3} parent=42 // loop_header
                  %s212 = sphi 0, %s216
                  %p213 = scmp.ge.s32.totalorder %s212, 1
                  %s217 = sphi %s160, %s160
                  %s218 = sphi %s152, %s152
                $region46: #{_forward_impl.3} parent=42 // loop_header_branch
                  %215 = sbr.rel (%p213) target = $region50
                $region47: #{_forward_impl.3} parent=42 // loop_body
                  _
                $region48: #{_forward_impl.3} parent=42 // loop_footer
                  %s216 = sadd.s32 1, %s212
                $region49: #{_forward_impl.3} parent=42 // loop_footer_branch
                  %211 = sbr.rel target = $region45
                $region50: #{_forward_impl.3} parent=42 // loop_exit
                  _
                %s220 = ssub.s32 16, 1
                loop: start=0, step=1, limit=1
                $region51: #{_forward_impl.3} parent=42 // loop_pre_header
                  _
                $region52: #{_forward_impl.3} parent=42 // loop_header
                  %s222 = sphi 0, %s226
                  %p223 = scmp.ge.s32.totalorder %s222, 1
                  %s227 = sphi %s160, %s160
                  %s228 = sphi %s152, %s152
                $region53: #{_forward_impl.3} parent=42 // loop_header_branch
                  %225 = sbr.rel (%p223) target = $region57
                $region54: #{_forward_impl.3} parent=42 // loop_body
                  %v229 = vld [vmem:[%s227] sm:%s220]
                  %230 = vst [vmem:[%s228] sm:%s220] %v229
                  %v231 = vld [vmem:[%s227 + $0xc] sm:%s220]
                  %232 = vst [vmem:[%s228 + $0x4] sm:%s220] %v231
                  %v233 = vld [vmem:[%s227 + $0x18] sm:%s220]
                  %234 = vst [vmem:[%s228 + $0x8] sm:%s220] %v233
                  %v235 = vld [vmem:[%s227 + $0x24] sm:%s220]
                  %236 = vst [vmem:[%s228 + $0xc] sm:%s220] %v235
                  %v237 = vld [vmem:[%s227 + $0x30] sm:%s220]
                  %238 = vst [vmem:[%s228 + $0x10] sm:%s220] %v237
                  %v239 = vld [vmem:[%s227 + $0x3c] sm:%s220]
                  %240 = vst [vmem:[%s228 + $0x14] sm:%s220] %v239
                  %v241 = vld [vmem:[%s227 + $0x48] sm:%s220]
                  %242 = vst [vmem:[%s228 + $0x18] sm:%s220] %v241
                  %v243 = vld [vmem:[%s227 + $0x54] sm:%s220]
                  %244 = vst [vmem:[%s228 + $0x1c] sm:%s220] %v243
                  %v245 = vld [vmem:[%s227 + $0x60] sm:%s220]
                  %246 = vst [vmem:[%s228 + $0x20] sm:%s220] %v245
                  %v247 = vld [vmem:[%s227 + $0x6c] sm:%s220]
                  %248 = vst [vmem:[%s228 + $0x24] sm:%s220] %v247
                  %v249 = vld [vmem:[%s227 + $0x78] sm:%s220]
                  %250 = vst [vmem:[%s228 + $0x28] sm:%s220] %v249
                  %v251 = vld [vmem:[%s227 + $0x84] sm:%s220]
                  %252 = vst [vmem:[%s228 + $0x2c] sm:%s220] %v251
                  %v253 = vld [vmem:[%s227 + $0x90] sm:%s220]
                  %254 = vst [vmem:[%s228 + $0x30] sm:%s220] %v253
                  %v255 = vld [vmem:[%s227 + $0x9c] sm:%s220]
                  %256 = vst [vmem:[%s228 + $0x34] sm:%s220] %v255
                  %v257 = vld [vmem:[%s227 + $0xa8] sm:%s220]
                  %258 = vst [vmem:[%s228 + $0x38] sm:%s220] %v257
                  %v259 = vld [vmem:[%s227 + $0xb4] sm:%s220]
                  %260 = vst [vmem:[%s228 + $0x3c] sm:%s220] %v259
                $region55: #{_forward_impl.3} parent=42 // loop_footer
                  %s226 = sadd.s32 1, %s222
                $region56: #{_forward_impl.3} parent=42 // loop_footer_branch
                  %221 = sbr.rel target = $region52
                $region57: #{_forward_impl.3} parent=42 // loop_exit
                  _
              $region43: #{_forward_impl.3} parent=27 // pred_fallthru
                _
            $region28: #{_forward_impl.3} parent=23 // pred_fallthru
              _
            // Predicated region
            $region29: #{_forward_impl.3} parent=23 // pred_check
              _
            $region30: #{_forward_impl.3} parent=23 // pred_check_branch
              %166 = sbr.rel (0) target = $region32
            $region31: #{_forward_impl.3} parent=23 // pred_region
              %s168 = ssub.s32 16, 1
              loop: start=0, step=1, limit=1
              $region33: #{_forward_impl.3} parent=31 // loop_pre_header
                _
              $region34: #{_forward_impl.3} parent=31 // loop_header
                %s170 = sphi 0, %s174
                %p171 = scmp.ge.s32.totalorder %s170, 1
                %s175 = sphi %s160, %s160
                %s176 = sphi %s152, %s152
              $region35: #{_forward_impl.3} parent=31 // loop_header_branch
                %173 = sbr.rel (%p171) target = $region39
              $region36: #{_forward_impl.3} parent=31 // loop_body
                %v177 = vld [vmem:[%s175] sm:%s168]
                %178 = vst [vmem:[%s176] sm:%s168] %v177
                %v179 = vld [vmem:[%s175 + $0xc] sm:%s168]
                %180 = vst [vmem:[%s176 + $0x4] sm:%s168] %v179
                %v181 = vld [vmem:[%s175 + $0x18] sm:%s168]
                %182 = vst [vmem:[%s176 + $0x8] sm:%s168] %v181
                %v183 = vld [vmem:[%s175 + $0x24] sm:%s168]
                %184 = vst [vmem:[%s176 + $0xc] sm:%s168] %v183
                %v185 = vld [vmem:[%s175 + $0x30] sm:%s168]
                %186 = vst [vmem:[%s176 + $0x10] sm:%s168] %v185
                %v187 = vld [vmem:[%s175 + $0x3c] sm:%s168]
                %188 = vst [vmem:[%s176 + $0x14] sm:%s168] %v187
                %v189 = vld [vmem:[%s175 + $0x48] sm:%s168]
                %190 = vst [vmem:[%s176 + $0x18] sm:%s168] %v189
                %v191 = vld [vmem:[%s175 + $0x54] sm:%s168]
                %192 = vst [vmem:[%s176 + $0x1c] sm:%s168] %v191
                %v193 = vld [vmem:[%s175 + $0x60] sm:%s168]
                %194 = vst [vmem:[%s176 + $0x20] sm:%s168] %v193
                %v195 = vld [vmem:[%s175 + $0x6c] sm:%s168]
                %196 = vst [vmem:[%s176 + $0x24] sm:%s168] %v195
                %v197 = vld [vmem:[%s175 + $0x78] sm:%s168]
                %198 = vst [vmem:[%s176 + $0x28] sm:%s168] %v197
                %v199 = vld [vmem:[%s175 + $0x84] sm:%s168]
                %200 = vst [vmem:[%s176 + $0x2c] sm:%s168] %v199
                %v201 = vld [vmem:[%s175 + $0x90] sm:%s168]
                %202 = vst [vmem:[%s176 + $0x30] sm:%s168] %v201
                %v203 = vld [vmem:[%s175 + $0x9c] sm:%s168]
                %204 = vst [vmem:[%s176 + $0x34] sm:%s168] %v203
                %v205 = vld [vmem:[%s175 + $0xa8] sm:%s168]
                %206 = vst [vmem:[%s176 + $0x38] sm:%s168] %v205
                %v207 = vld [vmem:[%s175 + $0xb4] sm:%s168]
                %208 = vst [vmem:[%s176 + $0x3c] sm:%s168] %v207
              $region37: #{_forward_impl.3} parent=31 // loop_footer
                %s174 = sadd.s32 1, %s170
              $region38: #{_forward_impl.3} parent=31 // loop_footer_branch
                %169 = sbr.rel target = $region34
              $region39: #{_forward_impl.3} parent=31 // loop_exit
                _
            $region32: #{_forward_impl.3} parent=23 // pred_fallthru
              _
          $region24: #{_forward_impl.3} parent=19 // pred_fallthru
            _
          %261 = vnop
        $region20: #{_forward_impl.3} parent=15 // pred_fallthru
          _
        // Predicated region
        $region58: #{_forward_impl.3} parent=15 // pred_check
          %p262 = pneg %p95
        $region59: #{_forward_impl.3} parent=15 // pred_check_branch
          %264 = sbr.rel (%p262) target = $region61
        $region60: #{_forward_impl.3} parent=15 // pred_region
          %s265 = smul.u32 %s30, 3
          %s266 = sadd.s32 %s265, %s31
          %s267 = sld [smem:[#allocation3 + %s266]]
          %s268 = smul.u32 16, %s267
          %p269 = scmp.lt.s32.totalorder %s268, 47
          %s270 = scalar_select %p269, %s268, 47
          %s271 = smul.addr %s270, 4
          %s272 = scalar_lea.vmem %s3, %s271
          %s273 = smul.u32 %s30, 3
          %s274 = sadd.s32 %s273, %s31
          %s275 = sld [smem:[#allocation3 + %s274]]
          %s276 = smul.u32 16, %s275
        $region61: #{_forward_impl.3} parent=15 // pred_fallthru
          _
      $region16: #{_forward_impl.3} parent=5 // pred_fallthru
        _
      %p277 = scmp.le.s32.totalorder 1, %s23
      %p278 = scmp.lt.s32.totalorder %s23, 10
      %p279 = pnand %p277, %p278
      %p280 = pneg %p279
      // Predicated region
      $region62: #{_forward_impl.3} parent=5 // pred_check
        _
      $region63: #{_forward_impl.3} parent=5 // pred_check_branch
        %282 = sbr.rel (%p279) target = $region65
      $region64: #{_forward_impl.3} parent=5 // pred_region
        %s283 = ssub.s32 %s23, 1
        %s284 = sand.u32 %s56, 1
        %s285 = sand.u32 %s56, 1
        %s286 = smul.addr %s285, 64
        %s287 = scalar_lea.vmem [#allocation5], %s286
        // Predicated region
        $region66: #{_forward_impl.3} parent=64 // pred_check
          %p288 = pneg %p69
        $region67: #{_forward_impl.3} parent=64 // pred_check_branch
          %290 = sbr.rel (%p288) target = $region69
        $region68: #{_forward_impl.3} parent=64 // pred_region
          _
        $region69: #{_forward_impl.3} parent=64 // pred_fallthru
          _
        %s291 = sand.u32 %s56, 1
        %s292 = sand.u32 %s56, 1
        %s293 = smul.addr %s292, 64
        %s294 = scalar_lea.vmem [#allocation5], %s293
        %p295 = pneg %p69
        %p296 = pneg %p66
        %s297 = smul.u32 %s32, 3
        %s298 = sadd.s32 %s297, %s33
        %s299 = sld [smem:[#allocation3 + %s298]]
        %s300 = smul.u32 16, %s299
        %p301 = scmp.lt.s32.totalorder %s300, 47
        %s302 = scalar_select %p301, %s300, 47
        %s303 = smul.addr %s302, 4
        %s304 = scalar_lea.vmem %s3, %s303
        %p305 = pneg %p101
        %p306 = pneg %p98
        %p307 = pneg %p127
        %p308 = pneg %p124
        %s309 = smul.u32 16, %s32
        %p310 = scmp.lt.s32.totalorder %s309, 47
        %s311 = scalar_select %p310, %s309, 47
        %s312 = smul.addr %s311, 8
        %s313 = scalar_lea.vmem %s4, %s312
        %s314 = smul.u32 %s32, 3
        %s315 = sadd.s32 %s314, %s33
        %s316 = sld [smem:[#allocation3 + %s315]]
        %s317 = smul.u32 16, %s32
        %s318 = smul.u32 %s32, 3
        %s319 = sadd.s32 %s318, %s33
        %s320 = sld [smem:[#allocation3 + %s319]]
        %s321 = smul.u32 16, %s320
        %p322 = scmp.lt.s32.totalorder %s321, 47
        %s323 = scalar_select %p322, %s321, 47
        %s324 = smul.addr %s323, 4
        %s325 = scalar_lea.vmem %s3, %s324
        %s326 = smul.u32 %s32, 3
        %s327 = sadd.s32 %s326, %s33
        %s328 = sld [smem:[#allocation3 + %s327]]
        %s329 = smul.u32 16, %s328
        %s330 = smul.u32 16, %s32
        %p331 = scmp.lt.s32.totalorder %s330, 47
        %s332 = scalar_select %p331, %s330, 47
        %s333 = smul.addr %s332, 8
        %s334 = scalar_lea.vmem %s4, %s333
        %s335 = smul.u32 16, %s32
        %p336 = scmp.eq.s32.totalorder %s33, 0
        // Predicated region
        $region70: #{_forward_impl.3} parent=64 // pred_check
          %p337 = pneg %p336
        $region71: #{_forward_impl.3} parent=64 // pred_check_branch
          %339 = sbr.rel (%p337) target = $region73
        $region72: #{_forward_impl.3} parent=64 // pred_region
          %340 = vst [vmem:[%s334] sm:$0xff] 0.0
          %341 = vst [vmem:[%s334 + $0x8] sm:$0xff] 0.0
          %342 = vst [vmem:[%s334 + $0x10] sm:$0xff] 0.0
          %343 = vst [vmem:[%s334 + $0x18] sm:$0xff] 0.0
          %344 = vst [vmem:[%s334 + $0x20] sm:$0xff] 0.0
          %345 = vst [vmem:[%s334 + $0x28] sm:$0xff] 0.0
          %346 = vst [vmem:[%s334 + $0x30] sm:$0xff] 0.0
          %347 = vst [vmem:[%s334 + $0x38] sm:$0xff] 0.0
          %348 = vst [vmem:[%s334 + $0x40] sm:$0xff] 0.0
          %349 = vst [vmem:[%s334 + $0x48] sm:$0xff] 0.0
          %350 = vst [vmem:[%s334 + $0x50] sm:$0xff] 0.0
          %351 = vst [vmem:[%s334 + $0x58] sm:$0xff] 0.0
          %352 = vst [vmem:[%s334 + $0x60] sm:$0xff] 0.0
          %353 = vst [vmem:[%s334 + $0x68] sm:$0xff] 0.0
          %354 = vst [vmem:[%s334 + $0x70] sm:$0xff] 0.0
          %355 = vst [vmem:[%s334 + $0x78] sm:$0xff] 0.0
        $region73: #{_forward_impl.3} parent=64 // pred_fallthru
          _
        %s356 = sld [smem:[#allocation4 + %s32]]
        %p357 = scmp.lt.s32.totalorder %s33, %s356
        // Predicated region
        $region74: #{_forward_impl.3} parent=64 // pred_check
          %p358 = pneg %p357
        $region75: #{_forward_impl.3} parent=64 // pred_check_branch
          %360 = sbr.rel (%p358) target = $region77
        $region76: #{_forward_impl.3} parent=64 // pred_region
          %v361 = vld [vmem:[%s334] sm:$0xff]
          %v362 = vld [vmem:[%s334 + $0x8] sm:$0xff]
          %v363 = vld [vmem:[%s334 + $0x10] sm:$0xff]
          %v364 = vld [vmem:[%s334 + $0x18] sm:$0xff]
          %v365 = vld [vmem:[%s334 + $0x20] sm:$0xff]
          %v366 = vld [vmem:[%s334 + $0x28] sm:$0xff]
          %v367 = vld [vmem:[%s334 + $0x30] sm:$0xff]
          %v368 = vld [vmem:[%s334 + $0x38] sm:$0xff]
          %v369 = vld [vmem:[%s334 + $0x40] sm:$0xff]
          %v370 = vld [vmem:[%s334 + $0x48] sm:$0xff]
          %v371 = vld [vmem:[%s334 + $0x50] sm:$0xff]
          %v372 = vld [vmem:[%s334 + $0x58] sm:$0xff]
          %v373 = vld [vmem:[%s334 + $0x60] sm:$0xff]
          %v374 = vld [vmem:[%s334 + $0x68] sm:$0xff]
          %v375 = vld [vmem:[%s334 + $0x70] sm:$0xff]
          %v376 = vld [vmem:[%s334 + $0x78] sm:$0xff]
          %v377 = vld [vmem:[%s287] sm:$0xf]
          %v378 = vld [vmem:[%s287 + $0x4] sm:$0xf]
          %v379 = vld [vmem:[%s287 + $0x8] sm:$0xf]
          %v380 = vld [vmem:[%s287 + $0xc] sm:$0xf]
          %v381 = vld [vmem:[%s287 + $0x10] sm:$0xf]
          %v382 = vld [vmem:[%s287 + $0x14] sm:$0xf]
          %v383 = vld [vmem:[%s287 + $0x18] sm:$0xf]
          %v384 = vld [vmem:[%s287 + $0x1c] sm:$0xf]
          %v385 = vld [vmem:[%s287 + $0x20] sm:$0xf]
          %v386 = vld [vmem:[%s287 + $0x24] sm:$0xf]
          %v387 = vld [vmem:[%s287 + $0x28] sm:$0xf]
          %v388 = vld [vmem:[%s287 + $0x2c] sm:$0xf]
          %v389 = vld [vmem:[%s287 + $0x30] sm:$0xf]
          %v390 = vld [vmem:[%s287 + $0x34] sm:$0xf]
          %v391 = vld [vmem:[%s287 + $0x38] sm:$0xf]
          %v392 = vld [vmem:[%s287 + $0x3c] sm:$0xf]
          %v393 = vld [vmem:[%s325] sm:$0xf]
          %v394 = vld [vmem:[%s325 + $0x4] sm:$0xf]
          %v395 = vld [vmem:[%s325 + $0x8] sm:$0xf]
          %v396 = vld [vmem:[%s325 + $0xc] sm:$0xf]
          %v397 = vld [vmem:[%s325 + $0x10] sm:$0xf]
          %v398 = vld [vmem:[%s325 + $0x14] sm:$0xf]
          %v399 = vld [vmem:[%s325 + $0x18] sm:$0xf]
          %v400 = vld [vmem:[%s325 + $0x1c] sm:$0xf]
          %v401 = vld [vmem:[%s325 + $0x20] sm:$0xf]
          %v402 = vld [vmem:[%s325 + $0x24] sm:$0xf]
          %v403 = vld [vmem:[%s325 + $0x28] sm:$0xf]
          %v404 = vld [vmem:[%s325 + $0x2c] sm:$0xf]
          %v405 = vld [vmem:[%s325 + $0x30] sm:$0xf]
          %v406 = vld [vmem:[%s325 + $0x34] sm:$0xf]
          %v407 = vld [vmem:[%s325 + $0x38] sm:$0xf]
          %v408 = vld [vmem:[%s325 + $0x3c] sm:$0xf]
          %v425 = vunpack.c.l.b16 %v377
          %v426 = vunpack.c.l.b16 %v378
          %v427 = vunpack.c.l.b16 %v379
          %v428 = vunpack.c.l.b16 %v380
          %v429 = vunpack.c.l.b16 %v381
          %v430 = vunpack.c.l.b16 %v382
          %v431 = vunpack.c.l.b16 %v383
          %v432 = vunpack.c.l.b16 %v384
          %v433 = vunpack.c.l.b16 %v385
          %v434 = vunpack.c.l.b16 %v386
          %v435 = vunpack.c.l.b16 %v387
          %v436 = vunpack.c.l.b16 %v388
          %v437 = vunpack.c.l.b16 %v389
          %v438 = vunpack.c.l.b16 %v390
          %v439 = vunpack.c.l.b16 %v391
          %v440 = vunpack.c.l.b16 %v392
          %v441 = vpack.c.b16 %v426, %v425
          %v442 = vpack.c.b16 %v428, %v427
          %v443 = vpack.c.b16 %v430, %v429
          %v444 = vpack.c.b16 %v432, %v431
          %v445 = vpack.c.b16 %v434, %v433
          %v446 = vpack.c.b16 %v436, %v435
          %v447 = vpack.c.b16 %v438, %v437
          %v448 = vpack.c.b16 %v440, %v439
          %v473 = vunpack.c.l.b16 %v393
          %v474 = vunpack.c.l.b16 %v394
          %v475 = vunpack.c.l.b16 %v395
          %v476 = vunpack.c.l.b16 %v396
          %v477 = vunpack.c.l.b16 %v397
          %v478 = vunpack.c.l.b16 %v398
          %v479 = vunpack.c.l.b16 %v399
          %v480 = vunpack.c.l.b16 %v400
          %v481 = vunpack.c.l.b16 %v401
          %v482 = vunpack.c.l.b16 %v402
          %v483 = vunpack.c.l.b16 %v403
          %v484 = vunpack.c.l.b16 %v404
          %v485 = vunpack.c.l.b16 %v405
          %v486 = vunpack.c.l.b16 %v406
          %v487 = vunpack.c.l.b16 %v407
          %v488 = vunpack.c.l.b16 %v408
          %v489 = vpack.c.b16 %v474, %v473
          %v490 = vpack.c.b16 %v476, %v475
          %v491 = vpack.c.b16 %v478, %v477
          %v492 = vpack.c.b16 %v480, %v479
          %v493 = vpack.c.b16 %v482, %v481
          %v494 = vpack.c.b16 %v484, %v483
          %v495 = vpack.c.b16 %v486, %v485
          %v496 = vpack.c.b16 %v488, %v487
          %505 = vmatpush.bf16.msra.mxu0 %v496
          %506 = vmatpush.bf16.msra.mxu0 %v495
          %507 = vmatpush.bf16.msra.mxu0 %v494
          %508 = vmatpush.bf16.msra.mxu0 %v493
          %509 = vmatpush.bf16.msra.mxu0 %v492
          %510 = vmatpush.bf16.msra.mxu0 %v491
          %511 = vmatpush.bf16.msra.mxu0 %v490
          %512 = vmatpush.bf16.msra.mxu0 %v489
          %513 = vmatmul.bf16.gmra.mxu0 %v441
          %v514 = vpop.f32.mrf.mxu0
          %v515 = vadd.f32 0.0, %v514
          %v516 = vpop.f32.mrf.mxu0
          %v517 = vadd.f32 0.0, %v516
          %518 = vmatmul.bf16.gmra.mxu0 %v442
          %v519 = vpop.f32.mrf.mxu0
          %v520 = vadd.f32 0.0, %v519
          %v521 = vpop.f32.mrf.mxu0
          %v522 = vadd.f32 0.0, %v521
          %523 = vmatmul.bf16.gmra.mxu0 %v443
          %v524 = vpop.f32.mrf.mxu0
          %v525 = vadd.f32 0.0, %v524
          %v526 = vpop.f32.mrf.mxu0
          %v527 = vadd.f32 0.0, %v526
          %528 = vmatmul.bf16.gmra.mxu0 %v444
          %v529 = vpop.f32.mrf.mxu0
          %v530 = vadd.f32 0.0, %v529
          %v531 = vpop.f32.mrf.mxu0
          %v532 = vadd.f32 0.0, %v531
          %533 = vmatmul.bf16.gmra.mxu0 %v445
          %v534 = vpop.f32.mrf.mxu0
          %v535 = vadd.f32 0.0, %v534
          %v536 = vpop.f32.mrf.mxu0
          %v537 = vadd.f32 0.0, %v536
          %538 = vmatmul.bf16.gmra.mxu0 %v446
          %v539 = vpop.f32.mrf.mxu0
          %v540 = vadd.f32 0.0, %v539
          %v541 = vpop.f32.mrf.mxu0
          %v542 = vadd.f32 0.0, %v541
          %543 = vmatmul.bf16.gmra.mxu0 %v447
          %v544 = vpop.f32.mrf.mxu0
          %v545 = vadd.f32 0.0, %v544
          %v546 = vpop.f32.mrf.mxu0
          %v547 = vadd.f32 0.0, %v546
          %548 = vmatmul.bf16.gmra.mxu0 %v448
          %v549 = vpop.f32.mrf.mxu0
          %v550 = vadd.f32 0.0, %v549
          %v551 = vpop.f32.mrf.mxu0
          %v552 = vadd.f32 0.0, %v551
          %553 = vdwg.mxu0
          %v554 = vadd.f32 %v361, %v515
          %v555 = vadd.f32 %v362, %v517
          %v556 = vadd.f32 %v363, %v520
          %v557 = vadd.f32 %v364, %v522
          %v558 = vadd.f32 %v365, %v525
          %v559 = vadd.f32 %v366, %v527
          %v560 = vadd.f32 %v367, %v530
          %v561 = vadd.f32 %v368, %v532
          %v562 = vadd.f32 %v369, %v535
          %v563 = vadd.f32 %v370, %v537
          %v564 = vadd.f32 %v371, %v540
          %v565 = vadd.f32 %v372, %v542
          %v566 = vadd.f32 %v373, %v545
          %v567 = vadd.f32 %v374, %v547
          %v568 = vadd.f32 %v375, %v550
          %v569 = vadd.f32 %v376, %v552
          %570 = vst [vmem:[%s334] sm:$0xff] %v554
          %571 = vst [vmem:[%s334 + $0x8] sm:$0xff] %v555
          %572 = vst [vmem:[%s334 + $0x10] sm:$0xff] %v556
          %573 = vst [vmem:[%s334 + $0x18] sm:$0xff] %v557
          %574 = vst [vmem:[%s334 + $0x20] sm:$0xff] %v558
          %575 = vst [vmem:[%s334 + $0x28] sm:$0xff] %v559
          %576 = vst [vmem:[%s334 + $0x30] sm:$0xff] %v560
          %577 = vst [vmem:[%s334 + $0x38] sm:$0xff] %v561
          %578 = vst [vmem:[%s334 + $0x40] sm:$0xff] %v562
          %579 = vst [vmem:[%s334 + $0x48] sm:$0xff] %v563
          %580 = vst [vmem:[%s334 + $0x50] sm:$0xff] %v564
          %581 = vst [vmem:[%s334 + $0x58] sm:$0xff] %v565
          %582 = vst [vmem:[%s334 + $0x60] sm:$0xff] %v566
          %583 = vst [vmem:[%s334 + $0x68] sm:$0xff] %v567
          %584 = vst [vmem:[%s334 + $0x70] sm:$0xff] %v568
          %585 = vst [vmem:[%s334 + $0x78] sm:$0xff] %v569
        $region77: #{_forward_impl.3} parent=64 // pred_fallthru
          _
        %p586 = scmp.eq.s32.totalorder %s33, 2
        // Predicated region
        $region78: #{_forward_impl.3} parent=64 // pred_check
          %p587 = pneg %p586
        $region79: #{_forward_impl.3} parent=64 // pred_check_branch
          %589 = sbr.rel (%p587) target = $region81
        $region80: #{_forward_impl.3} parent=64 // pred_region
          %v590 = vld [vmem:[%s334] sm:$0xff]
          %v591 = vld [vmem:[%s334 + $0x8] sm:$0xff]
          %v592 = vld [vmem:[%s334 + $0x10] sm:$0xff]
          %v593 = vld [vmem:[%s334 + $0x18] sm:$0xff]
          %v594 = vld [vmem:[%s334 + $0x20] sm:$0xff]
          %v595 = vld [vmem:[%s334 + $0x28] sm:$0xff]
          %v596 = vld [vmem:[%s334 + $0x30] sm:$0xff]
          %v597 = vld [vmem:[%s334 + $0x38] sm:$0xff]
          %v598 = vld [vmem:[%s334 + $0x40] sm:$0xff]
          %v599 = vld [vmem:[%s334 + $0x48] sm:$0xff]
          %v600 = vld [vmem:[%s334 + $0x50] sm:$0xff]
          %v601 = vld [vmem:[%s334 + $0x58] sm:$0xff]
          %v602 = vld [vmem:[%s334 + $0x60] sm:$0xff]
          %v603 = vld [vmem:[%s334 + $0x68] sm:$0xff]
          %v604 = vld [vmem:[%s334 + $0x70] sm:$0xff]
          %v605 = vld [vmem:[%s334 + $0x78] sm:$0xff]
          %v606 = vmax.f32 %v590, 0.0
          %v607 = vmax.f32 %v591, 0.0
          %v608 = vmax.f32 %v592, 0.0
          %v609 = vmax.f32 %v593, 0.0
          %v610 = vmax.f32 %v594, 0.0
          %v611 = vmax.f32 %v595, 0.0
          %v612 = vmax.f32 %v596, 0.0
          %v613 = vmax.f32 %v597, 0.0
          %v614 = vmax.f32 %v598, 0.0
          %v615 = vmax.f32 %v599, 0.0
          %v616 = vmax.f32 %v600, 0.0
          %v617 = vmax.f32 %v601, 0.0
          %v618 = vmax.f32 %v602, 0.0
          %v619 = vmax.f32 %v603, 0.0
          %v620 = vmax.f32 %v604, 0.0
          %v621 = vmax.f32 %v605, 0.0
          %622 = vst [vmem:[%s334] sm:$0xff] %v606
          %623 = vst [vmem:[%s334 + $0x8] sm:$0xff] %v607
          %624 = vst [vmem:[%s334 + $0x10] sm:$0xff] %v608
          %625 = vst [vmem:[%s334 + $0x18] sm:$0xff] %v609
          %626 = vst [vmem:[%s334 + $0x20] sm:$0xff] %v610
          %627 = vst [vmem:[%s334 + $0x28] sm:$0xff] %v611
          %628 = vst [vmem:[%s334 + $0x30] sm:$0xff] %v612
          %629 = vst [vmem:[%s334 + $0x38] sm:$0xff] %v613
          %630 = vst [vmem:[%s334 + $0x40] sm:$0xff] %v614
          %631 = vst [vmem:[%s334 + $0x48] sm:$0xff] %v615
          %632 = vst [vmem:[%s334 + $0x50] sm:$0xff] %v616
          %633 = vst [vmem:[%s334 + $0x58] sm:$0xff] %v617
          %634 = vst [vmem:[%s334 + $0x60] sm:$0xff] %v618
          %635 = vst [vmem:[%s334 + $0x68] sm:$0xff] %v619
          %636 = vst [vmem:[%s334 + $0x70] sm:$0xff] %v620
          %637 = vst [vmem:[%s334 + $0x78] sm:$0xff] %v621
        $region81: #{_forward_impl.3} parent=64 // pred_fallthru
          _
        %s638 = smul.u32 16, %s32
        %p639 = scmp.lt.s32.totalorder %s638, 47
        %s640 = scalar_select %p639, %s638, 47
        %s641 = smul.addr %s640, 8
        %s642 = scalar_lea.vmem %s4, %s641
        // Predicated region
        $region82: #{_forward_impl.3} parent=64 // pred_check
          %p643 = pneg %p124
        $region83: #{_forward_impl.3} parent=64 // pred_check_branch
          %645 = sbr.rel (%p643) target = $region85
        $region84: #{_forward_impl.3} parent=64 // pred_region
          %s646 = smul.u32 16, %s32
        $region85: #{_forward_impl.3} parent=64 // pred_fallthru
          _
      $region65: #{_forward_impl.3} parent=5 // pred_fallthru
        _
      %p647 = scmp.le.s32.totalorder 2, %s23
      // Predicated region
      $region86: #{_forward_impl.3} parent=5 // pred_check
        %p648 = pneg %p647
      $region87: #{_forward_impl.3} parent=5 // pred_check_branch
        %650 = sbr.rel (%p648) target = $region89
      $region88: #{_forward_impl.3} parent=5 // pred_region
        %s651 = ssub.s32 %s23, 2
        // Predicated region
        $region90: #{_forward_impl.3} parent=88 // pred_check
          %p652 = pneg %p130
        $region91: #{_forward_impl.3} parent=88 // pred_check_branch
          %654 = sbr.rel (%p652) target = $region93
        $region92: #{_forward_impl.3} parent=88 // pred_region
          %s655 = smul.u32 16, %s34
          %p656 = scmp.lt.s32.totalorder %s655, 47
          %s657 = scalar_select %p656, %s655, 47
          %s658 = smul.addr %s657, 8
          %s659 = scalar_lea.vmem %s4, %s658
        $region93: #{_forward_impl.3} parent=88 // pred_fallthru
          _
      $region89: #{_forward_impl.3} parent=5 // pred_fallthru
        _
    $region6: #{_forward_impl.3} parent=1 // loop_footer
      %s27 = sadd.s32 1, %s23
    $region7: #{_forward_impl.3} parent=1 // loop_footer_branch
      %22 = sbr.rel target = $region3
    $region8: #{_forward_impl.3} parent=1 // loop_exit
      _

</llo_original>
